<compile_context>
chip_gen: v5e
topology: v5e:2x2
jax: 0.10.0
libtpu: 0.0.40
codegen_flags: <defaults>
</compile_context>

<pallas_src>
from functools import partial

import jax
import jax.numpy as jnp
from jax.experimental import pallas as pl
from jax.experimental.pallas import tpu as pltpu


def _round_up(x, m):
    return ((x + m - 1) // m) * m


def _pad_batch(b):
    b_pad = _round_up(max(b, 8), 8)
    if b_pad > 128:
        b_pad = _round_up(b_pad, 128)
    return b_pad


# --------------------------------------------------------------------------------------
# Kernel: SMEM token gather + hidden carried in VMEM scratch across the time grid axis
# --------------------------------------------------------------------------------------
def _decoder_kernel(tok_ref, emb_ref, h0_ref, wrnn_ref, brnn_ref, wfc_ref, bfc_ref,
                    pred_ref, hout_ref, emb_sc, h_sc):
    b = pl.program_id(0)                 # batch tile   ("parallel")
    t = pl.program_id(1)                 # decode step  ("arbitrary", sequential carry)
    tb = h0_ref.shape[0]
    v_rows = emb_ref.shape[0]

    # (1) Load the incoming hidden state once per batch tile; it then lives in VMEM
    #     scratch for every time step of this tile.
    @pl.when(t == 0)
    def _():
        h_sc[...] = h0_ref[...]

    # (2) Embedding gather: token ids read from SMEM, one table row per batch element
    #     (static store index, dynamic load index). tb is a Python int -> unrolled.
    col0 = b * tb
    for i in range(tb):
        tok = tok_ref[t, col0 + i]
        tok = jnp.clip(tok, 0, v_rows - 1)      # guard: OOB id can never read OOB VMEM
        emb_sc[pl.ds(i, 1), :] = emb_ref[pl.ds(tok, 1), :]

    # (3) RNN cell as ONE merged matmul: h' = tanh([x, h] @ [[W_ih]; [W_hh]] + b)
    xh = jnp.concatenate([emb_sc[...], h_sc[...]], axis=-1)
    h_new = jnp.tanh(
        jnp.dot(xh, wrnn_ref[...], preferred_element_type=jnp.float32) + brnn_ref[...])
    h_sc[...] = h_new

    # (4) fc projection for this step (lane-dense (tb, O_pad) store).
    pred_ref[0] = (jnp.dot(h_new, wfc_ref[...], preferred_element_type=jnp.float32)
                   + bfc_ref[...])

    # (5) Write the final hidden state back to HBM once per batch tile.
    @pl.when(t == pl.num_programs(1) - 1)
    def _():
        hout_ref[...] = h_new


def _decoder_pallas(tok_pad, h_pad, emb_tab, w_rnn, b_rnn, w_fc, b_fc):
    """tok_pad: (T, B_pad) int32 in SMEM; h_pad: (B_pad, H_pad) f32 (zero padded).
    Returns (preds (T, B_pad, O_pad), h_new (B_pad, H_pad))."""
    T, B_pad = tok_pad.shape
    _, H_pad = h_pad.shape
    V_pad, E_pad = emb_tab.shape
    KC = w_rnn.shape[0]                  # E_pad + H_pad
    O_pad = w_fc.shape[1]

    tb = min(B_pad, 128)                 # B_pad is a multiple of tb by construction
    n_bt = B_pad // tb

    full2 = lambda shape: pl.BlockSpec(shape, lambda b, t: (0, 0))

    preds, h_new = pl.pallas_call(
        _decoder_kernel,
        out_shape=(jax.ShapeDtypeStruct((T, B_pad, O_pad), jnp.float32),
                   jax.ShapeDtypeStruct((B_pad, H_pad), jnp.float32)),
        grid=(n_bt, T),
        in_specs=[pl.BlockSpec(memory_space=pltpu.MemorySpace.SMEM),   # token ids (SMEM)
                  full2((V_pad, E_pad)),                               # embedding table
                  pl.BlockSpec((tb, H_pad), lambda b, t: (b, 0)),      # h0 (aliased)
                  full2((KC, H_pad)),                                  # fused [W_ih; W_hh]
                  full2((1, H_pad)),                                   # b_ih + b_hh
                  full2((H_pad, O_pad)),                               # W_fc
                  full2((1, O_pad))],                                  # b_fc
        out_specs=(pl.BlockSpec((1, tb, O_pad), lambda b, t: (t, b, 0)),
                   pl.BlockSpec((tb, H_pad), lambda b, t: (b, 0))),
        scratch_shapes=[pltpu.VMEM((tb, E_pad), jnp.float32),          # gathered embeds
                        pltpu.VMEM((tb, H_pad), jnp.float32)],         # hidden carry
        input_output_aliases={2: 1},     # hidden in -> hidden out (in-place update)
        compiler_params=pltpu.CompilerParams(
            dimension_semantics=("parallel", "arbitrary"),
            vmem_limit_bytes=32 * 1024 * 1024),
    )(tok_pad, emb_tab, h_pad, w_rnn, b_rnn, w_fc, b_fc)
    return preds, h_new


# --------------------------------------------------------------------------------------
# jitted functional entry points
# --------------------------------------------------------------------------------------
@partial(jax.jit, static_argnames=("output_dim", "hidden_dim"))
def _forward_single_step(tokens, hidden, emb_tab, w_rnn, b_rnn, w_fc, b_fc,
                         *, output_dim, hidden_dim):
    """Exact PyTorch-semantics single step: pad -> kernel (T=1) -> slice."""
    B = tokens.shape[0]
    H_pad = w_rnn.shape[1]
    B_pad = _pad_batch(B)
    tok_pad = jnp.zeros((1, B_pad), jnp.int32).at[0, :B].set(tokens.astype(jnp.int32))
    h_pad = jnp.zeros((B_pad, H_pad), jnp.float32).at[:B, :hidden_dim].set(hidden[0])
    preds, h_new = _decoder_pallas(tok_pad, h_pad, emb_tab, w_rnn, b_rnn, w_fc, b_fc)
    return preds[0, :B, :output_dim], h_new[:B, :hidden_dim][None, :, :]


@partial(jax.jit, static_argnames=("output_dim", "hidden_dim"))
def _decode_sequence(tokens_seq, hidden, emb_tab, w_rnn, b_rnn, w_fc, b_fc,
                     *, output_dim, hidden_dim):
    """Whole decode loop inside one kernel launch (time is a grid axis)."""
    T, B = tokens_seq.shape
    H_pad = w_rnn.shape[1]
    B_pad = _pad_batch(B)
    tok_pad = (jnp.zeros((T, B_pad), jnp.int32)
               .at[:, :B].set(tokens_seq.astype(jnp.int32)))
    h_pad = jnp.zeros((B_pad, H_pad), jnp.float32).at[:B, :hidden_dim].set(hidden[0])
    preds, h_new = _decoder_pallas(tok_pad, h_pad, emb_tab, w_rnn, b_rnn, w_fc, b_fc)
    return preds[:, :B, :output_dim], h_new[:B, :hidden_dim][None, :, :]


@partial(jax.jit, donate_argnums=(1,))
def _step_padded(tokens_pad, h_pad, emb_tab, w_rnn, b_rnn, w_fc, b_fc):
    """Step-at-a-time API that keeps state padded: no per-token pad/slice, hidden buffer
    is donated so the pallas alias updates it in place. Padded rows (>= batch) carry
    harmless garbage (rows never mix in an RNN) and are sliced off by the reader."""
    preds, h_new = _decoder_pallas(tokens_pad[None, :], h_pad,
                                   emb_tab, w_rnn, b_rnn, w_fc, b_fc)
    return preds[0], h_new


# --------------------------------------------------------------------------------------
# Module wrapper (mirrors torch Decoder(output_dim, embed_dim, hidden_dim))
# --------------------------------------------------------------------------------------
class DecoderPallas:
    def __init__(self, output_dim, embed_dim, hidden_dim, key):
        ks = jax.random.split(key, 6)
        self.output_dim = output_dim
        self.embed_dim = embed_dim
        self.hidden_dim = hidden_dim

        # raw parameters (linear weights stored transposed: (in_features, out_features))
        self.embedding = jax.random.normal(ks[0], (output_dim, embed_dim), jnp.float32)
        self.w_ih = jax.random.normal(ks[1], (embed_dim, hidden_dim), jnp.float32) * 0.1
        self.w_hh = jax.random.normal(ks[2], (hidden_dim, hidden_dim), jnp.float32) * 0.1
        self.b_ih = jax.random.normal(ks[3], (hidden_dim,), jnp.float32) * 0.1
        self.b_hh = jax.random.normal(ks[4], (hidden_dim,), jnp.float32) * 0.1
        self.w_fc = jax.random.normal(ks[5], (hidden_dim, output_dim), jnp.float32) * 0.1
        self.b_fc = jnp.zeros((output_dim,), jnp.float32)

        # padded / fused kernel operands, built ONCE (lane dims -> multiples of 128).
        # (Bump to 256 multiples on v6e/v7x only once true dims reach >=128.)
        E_pad = _round_up(embed_dim, 128)
        H_pad = _round_up(hidden_dim, 128)
        O_pad = _round_up(output_dim, 128)
        V_pad = _round_up(output_dim, 8)
        self._H_pad = H_pad

        self._emb_pad = (jnp.zeros((V_pad, E_pad), jnp.float32)
                         .at[:output_dim, :embed_dim].set(self.embedding))

        w_rnn = jnp.zeros((E_pad + H_pad, H_pad), jnp.float32)
        w_rnn = w_rnn.at[:embed_dim, :hidden_dim].set(self.w_ih)
        w_rnn = w_rnn.at[E_pad:E_pad + hidden_dim, :hidden_dim].set(self.w_hh)
        self._w_rnn = w_rnn

        self._b_rnn = (jnp.zeros((1, H_pad), jnp.float32)
                       .at[0, :hidden_dim].set(self.b_ih + self.b_hh))
        self._w_fc = (jnp.zeros((H_pad, O_pad), jnp.float32)
                      .at[:hidden_dim, :output_dim].set(self.w_fc))
        self._b_fc = (jnp.zeros((1, O_pad), jnp.float32)
                      .at[0, :output_dim].set(self.b_fc))

    # ---- exact PyTorch semantics ------------------------------------------------------
    def forward(self, tokens, hidden):
        """tokens: (batch,) int32 ; hidden: (1, batch, hidden_dim) f32."""
        return _forward_single_step(tokens, hidden, self._emb_pad, self._w_rnn,
                                    self._b_rnn, self._w_fc, self._b_fc,
                                    output_dim=self.output_dim,
                                    hidden_dim=self.hidden_dim)

    # ---- in-kernel multi-step decode --------------------------------------------------
    def decode(self, tokens_seq, hidden):
        """tokens_seq: (T, batch) int32 ; hidden: (1, batch, hidden_dim) f32."""
        return _decode_sequence(tokens_seq, hidden, self._emb_pad, self._w_rnn,
                                self._b_rnn, self._w_fc, self._b_fc,
                                output_dim=self.output_dim,
                                hidden_dim=self.hidden_dim)

    # ---- padded, state-resident stepping ----------------------------------------------
    def init_hidden(self, hidden):
        B = hidden.shape[1]
        B_pad = _pad_batch(B)
        return (jnp.zeros((B_pad, self._H_pad), jnp.float32)
                .at[:B, :self.hidden_dim].set(hidden[0]))

    def pad_tokens(self, tokens):
        B = tokens.shape[0]
        B_pad = _pad_batch(B)
        return jnp.zeros((B_pad,), jnp.int32).at[:B].set(tokens.astype(jnp.int32))

    def step_padded(self, tokens_pad, h_pad):
        return _step_padded(tokens_pad, h_pad, self._emb_pad, self._w_rnn,
                            self._b_rnn, self._w_fc, self._b_fc)

    def read_prediction(self, pred_pad, batch):
        return pred_pad[:batch, :self.output_dim]

    def read_hidden(self, h_pad, batch):
        return h_pad[:batch, :self.hidden_dim][None, :, :]


# --------------------------------------------------------------------------------------
# pure-JAX references
# --------------------------------------------------------------------------------------
def _reference_step(dec, tokens, hidden):
    emb = dec.embedding[tokens]
    h0 = hidden[0]
    h_new = jnp.tanh(emb @ dec.w_ih + h0 @ dec.w_hh + dec.b_ih + dec.b_hh)
    pred = h_new @ dec.w_fc + dec.b_fc
    return pred, h_new[None, :, :]


def _reference_decode(dec, tokens_seq, hidden):
    h = hidden[0]
    preds = []
    for t in range(tokens_seq.shape[0]):
        emb = dec.embedding[tokens_seq[t]]
        h = jnp.tanh(emb @ dec.w_ih + h @ dec.w_hh + dec.b_ih + dec.b_hh)
        preds.append(h @ dec.w_fc + dec.b_fc)
    return jnp.stack(preds), h[None, :, :]


if __name__ == "__main__":
    key = jax.random.PRNGKey(0)
    k_param, k_tok, k_hid, k_seq = jax.random.split(key, 4)

    output_dim, embed_dim, hidden_dim = 32, 16, 32
    batch, T = 8, 4

    dec = DecoderPallas(output_dim, embed_dim, hidden_dim, k_param)

    tokens = jax.random.randint(k_tok, (batch,), 0, output_dim, dtype=jnp.int32)
    hidden = jax.random.normal(k_hid, (1, batch, hidden_dim), jnp.float32)
    tokens_seq = jax.random.randint(k_seq, (T, batch), 0, output_dim, dtype=jnp.int32)

    # (a) exact single-step forward (PyTorch semantics)
    pred, h_new = dec.forward(tokens, hidden)
    jax.block_until_ready((pred, h_new))
    ref_pred, ref_h = _reference_step(dec, tokens, hidden)
    assert pred.shape == (batch, output_dim)
    assert h_new.shape == (1, batch, hidden_dim)
    assert jnp.allclose(pred, ref_pred, atol=1e-4, rtol=1e-4)
    assert jnp.allclose(h_new, ref_h, atol=1e-4, rtol=1e-4)

    # (b) whole decode loop inside ONE kernel launch (time grid axis)
    preds_seq, h_T = dec.decode(tokens_seq, hidden)
    jax.block_until_ready((preds_seq, h_T))
    ref_preds_seq, ref_h_T = _reference_decode(dec, tokens_seq, hidden)
    assert preds_seq.shape == (T, batch, output_dim)
    assert h_T.shape == (1, batch, hidden_dim)
    assert jnp.allclose(preds_seq, ref_preds_seq, atol=1e-4, rtol=1e-4)
    assert jnp.allclose(h_T, ref_h_T, atol=1e-4, rtol=1e-4)

    # (c) step-at-a-time with padded, donated (in-place aliased) hidden state
    h_pad = dec.init_hidden(hidden)
    pred_pad = None
    for t in range(T):
        tok_pad = dec.pad_tokens(tokens_seq[t])
        pred_pad, h_pad = dec.step_padded(tok_pad, h_pad)
    jax.block_until_ready((pred_pad, h_pad))
    assert jnp.allclose(dec.read_prediction(pred_pad, batch),
                        ref_preds_seq[-1], atol=1e-4, rtol=1e-4)
    assert jnp.allclose(dec.read_hidden(h_pad, batch), ref_h_T, atol=1e-4, rtol=1e-4)

    print("KERNEL_OK")
</pallas_src>

<mosaic_0001>
module attributes {stable_mosaic.version = 11 : i64} {
  func.func @_decoder_kernel(%arg0: i32, %arg1: i32, %arg2: memref<1x8xi32, #tpu.memory_space<smem>>, %arg3: memref<32x128xf32, #tpu.memory_space<vmem>>, %arg4: memref<8x128xf32, #tpu.memory_space<vmem>>, %arg5: memref<256x128xf32, #tpu.memory_space<vmem>>, %arg6: memref<1x128xf32, #tpu.memory_space<vmem>>, %arg7: memref<128x128xf32, #tpu.memory_space<vmem>>, %arg8: memref<1x128xf32, #tpu.memory_space<vmem>>, %arg9: memref<1x8x128xf32, #tpu.memory_space<vmem>>, %arg10: memref<8x128xf32, #tpu.memory_space<vmem>>, %arg11: memref<8x128xf32, #tpu.memory_space<vmem>>, %arg12: memref<8x128xf32, #tpu.memory_space<vmem>>) attributes {dimension_semantics = [#tpu.dimension_semantics<parallel>, #tpu.dimension_semantics<arbitrary>], iteration_bounds = array<i64: 1, 1>, scalar_prefetch = 0 : i64, scratch_operands = 2 : i64, tpu.core_type = #tpu.core_type<tc>, window_params = [{transform_indices = @transform_0, window_bounds = array<i64: 1, 8>}, {pipeline_mode = #tpu.pipeline_mode<synchronous>, transform_indices = @transform_1, window_bounds = array<i64: 32, 128>}, {transform_indices = @transform_2, window_bounds = array<i64: 8, 128>}, {pipeline_mode = #tpu.pipeline_mode<synchronous>, transform_indices = @transform_3, window_bounds = array<i64: 256, 128>}, {pipeline_mode = #tpu.pipeline_mode<synchronous>, transform_indices = @transform_4, window_bounds = array<i64: 1, 128>}, {pipeline_mode = #tpu.pipeline_mode<synchronous>, transform_indices = @transform_5, window_bounds = array<i64: 128, 128>}, {pipeline_mode = #tpu.pipeline_mode<synchronous>, transform_indices = @transform_6, window_bounds = array<i64: 1, 128>}, {transform_indices = @transform_7, window_bounds = array<i64: 1, 8, 128>}, {transform_indices = @transform_8, window_bounds = array<i64: 8, 128>}]} {
    %c0_i32 = arith.constant 0 : i32
    %0 = arith.cmpi eq, %arg1, %c0_i32 : i32
    %1 = arith.extui %0 : i1 to i32
    %c0_i32_0 = arith.constant 0 : i32
    %2 = arith.cmpi ne, %1, %c0_i32_0 : i32
    scf.if %2 {
      %c0_53 = arith.constant 0 : index
      %c0_54 = arith.constant 0 : index
      %97 = vector.load %arg4[%c0_53, %c0_54] : memref<8x128xf32, #tpu.memory_space<vmem>>, vector<8x128xf32>
      %c0_55 = arith.constant 0 : index
      %c0_56 = arith.constant 0 : index
      %98 = vector.load %arg12[%c0_55, %c0_56] : memref<8x128xf32, #tpu.memory_space<vmem>>, vector<8x128xf32>
      tpu.vector_store %arg12[%c0_55, %c0_56], %97 {strides = array<i32>} : memref<8x128xf32, #tpu.memory_space<vmem>>, vector<8x128xf32>,
    } else {
    }
    %c8_i32 = arith.constant 8 : i32
    %3 = arith.muli %arg0, %c8_i32 : i32
    %c0_i32_1 = arith.constant 0 : i32
    %4 = arith.addi %3, %c0_i32_1 : i32
    %5 = arith.index_cast %arg1 : i32 to index
    %6 = arith.index_cast %4 : i32 to index
    %7 = memref.load %arg2[%5, %6] : memref<1x8xi32, #tpu.memory_space<smem>>
    %c0_i32_2 = arith.constant 0 : i32
    %c31_i32 = arith.constant 31 : i32
    %8 = arith.maxsi %c0_i32_2, %7 : i32
    %9 = arith.minsi %c31_i32, %8 : i32
    %10 = arith.index_cast %9 : i32 to index
    %c0 = arith.constant 0 : index
    %11 = vector.load %arg3[%10, %c0] : memref<32x128xf32, #tpu.memory_space<vmem>>, vector<1x128xf32>
    %c0_3 = arith.constant 0 : index
    %c0_4 = arith.constant 0 : index
    %12 = vector.load %arg11[%c0_3, %c0_4] : memref<8x128xf32, #tpu.memory_space<vmem>>, vector<1x128xf32>
    tpu.vector_store %arg11[%c0_3, %c0_4], %11 {strides = array<i32>} : memref<8x128xf32, #tpu.memory_space<vmem>>, vector<1x128xf32>,
    %c1_i32 = arith.constant 1 : i32
    %13 = arith.addi %3, %c1_i32 : i32
    %14 = arith.index_cast %arg1 : i32 to index
    %15 = arith.index_cast %13 : i32 to index
    %16 = memref.load %arg2[%14, %15] : memref<1x8xi32, #tpu.memory_space<smem>>
    %c0_i32_5 = arith.constant 0 : i32
    %c31_i32_6 = arith.constant 31 : i32
    %17 = arith.maxsi %c0_i32_5, %16 : i32
    %18 = arith.minsi %c31_i32_6, %17 : i32
    %19 = arith.index_cast %18 : i32 to index
    %c0_7 = arith.constant 0 : index
    %20 = vector.load %arg3[%19, %c0_7] : memref<32x128xf32, #tpu.memory_space<vmem>>, vector<1x128xf32>
    %c1 = arith.constant 1 : index
    %c0_8 = arith.constant 0 : index
    %21 = vector.load %arg11[%c1, %c0_8] : memref<8x128xf32, #tpu.memory_space<vmem>>, vector<1x128xf32>
    tpu.vector_store %arg11[%c1, %c0_8], %20 {strides = array<i32>} : memref<8x128xf32, #tpu.memory_space<vmem>>, vector<1x128xf32>,
    %c2_i32 = arith.constant 2 : i32
    %22 = arith.addi %3, %c2_i32 : i32
    %23 = arith.index_cast %arg1 : i32 to index
    %24 = arith.index_cast %22 : i32 to index
    %25 = memref.load %arg2[%23, %24] : memref<1x8xi32, #tpu.memory_space<smem>>
    %c0_i32_9 = arith.constant 0 : i32
    %c31_i32_10 = arith.constant 31 : i32
    %26 = arith.maxsi %c0_i32_9, %25 : i32
    %27 = arith.minsi %c31_i32_10, %26 : i32
    %28 = arith.index_cast %27 : i32 to index
    %c0_11 = arith.constant 0 : index
    %29 = vector.load %arg3[%28, %c0_11] : memref<32x128xf32, #tpu.memory_space<vmem>>, vector<1x128xf32>
    %c2 = arith.constant 2 : index
    %c0_12 = arith.constant 0 : index
    %30 = vector.load %arg11[%c2, %c0_12] : memref<8x128xf32, #tpu.memory_space<vmem>>, vector<1x128xf32>
    tpu.vector_store %arg11[%c2, %c0_12], %29 {strides = array<i32>} : memref<8x128xf32, #tpu.memory_space<vmem>>, vector<1x128xf32>,
    %c3_i32 = arith.constant 3 : i32
    %31 = arith.addi %3, %c3_i32 : i32
    %32 = arith.index_cast %arg1 : i32 to index
    %33 = arith.index_cast %31 : i32 to index
    %34 = memref.load %arg2[%32, %33] : memref<1x8xi32, #tpu.memory_space<smem>>
    %c0_i32_13 = arith.constant 0 : i32
    %c31_i32_14 = arith.constant 31 : i32
    %35 = arith.maxsi %c0_i32_13, %34 : i32
    %36 = arith.minsi %c31_i32_14, %35 : i32
    %37 = arith.index_cast %36 : i32 to index
    %c0_15 = arith.constant 0 : index
    %38 = vector.load %arg3[%37, %c0_15] : memref<32x128xf32, #tpu.memory_space<vmem>>, vector<1x128xf32>
    %c3 = arith.constant 3 : index
    %c0_16 = arith.constant 0 : index
    %39 = vector.load %arg11[%c3, %c0_16] : memref<8x128xf32, #tpu.memory_space<vmem>>, vector<1x128xf32>
    tpu.vector_store %arg11[%c3, %c0_16], %38 {strides = array<i32>} : memref<8x128xf32, #tpu.memory_space<vmem>>, vector<1x128xf32>,
    %c4_i32 = arith.constant 4 : i32
    %40 = arith.addi %3, %c4_i32 : i32
    %41 = arith.index_cast %arg1 : i32 to index
    %42 = arith.index_cast %40 : i32 to index
    %43 = memref.load %arg2[%41, %42] : memref<1x8xi32, #tpu.memory_space<smem>>
    %c0_i32_17 = arith.constant 0 : i32
    %c31_i32_18 = arith.constant 31 : i32
    %44 = arith.maxsi %c0_i32_17, %43 : i32
    %45 = arith.minsi %c31_i32_18, %44 : i32
    %46 = arith.index_cast %45 : i32 to index
    %c0_19 = arith.constant 0 : index
    %47 = vector.load %arg3[%46, %c0_19] : memref<32x128xf32, #tpu.memory_space<vmem>>, vector<1x128xf32>
    %c4 = arith.constant 4 : index
    %c0_20 = arith.constant 0 : index
    %48 = vector.load %arg11[%c4, %c0_20] : memref<8x128xf32, #tpu.memory_space<vmem>>, vector<1x128xf32>
    tpu.vector_store %arg11[%c4, %c0_20], %47 {strides = array<i32>} : memref<8x128xf32, #tpu.memory_space<vmem>>, vector<1x128xf32>,
    %c5_i32 = arith.constant 5 : i32
    %49 = arith.addi %3, %c5_i32 : i32
    %50 = arith.index_cast %arg1 : i32 to index
    %51 = arith.index_cast %49 : i32 to index
    %52 = memref.load %arg2[%50, %51] : memref<1x8xi32, #tpu.memory_space<smem>>
    %c0_i32_21 = arith.constant 0 : i32
    %c31_i32_22 = arith.constant 31 : i32
    %53 = arith.maxsi %c0_i32_21, %52 : i32
    %54 = arith.minsi %c31_i32_22, %53 : i32
    %55 = arith.index_cast %54 : i32 to index
    %c0_23 = arith.constant 0 : index
    %56 = vector.load %arg3[%55, %c0_23] : memref<32x128xf32, #tpu.memory_space<vmem>>, vector<1x128xf32>
    %c5 = arith.constant 5 : index
    %c0_24 = arith.constant 0 : index
    %57 = vector.load %arg11[%c5, %c0_24] : memref<8x128xf32, #tpu.memory_space<vmem>>, vector<1x128xf32>
    tpu.vector_store %arg11[%c5, %c0_24], %56 {strides = array<i32>} : memref<8x128xf32, #tpu.memory_space<vmem>>, vector<1x128xf32>,
    %c6_i32 = arith.constant 6 : i32
    %58 = arith.addi %3, %c6_i32 : i32
    %59 = arith.index_cast %arg1 : i32 to index
    %60 = arith.index_cast %58 : i32 to index
    %61 = memref.load %arg2[%59, %60] : memref<1x8xi32, #tpu.memory_space<smem>>
    %c0_i32_25 = arith.constant 0 : i32
    %c31_i32_26 = arith.constant 31 : i32
    %62 = arith.maxsi %c0_i32_25, %61 : i32
    %63 = arith.minsi %c31_i32_26, %62 : i32
    %64 = arith.index_cast %63 : i32 to index
    %c0_27 = arith.constant 0 : index
    %65 = vector.load %arg3[%64, %c0_27] : memref<32x128xf32, #tpu.memory_space<vmem>>, vector<1x128xf32>
    %c6 = arith.constant 6 : index
    %c0_28 = arith.constant 0 : index
    %66 = vector.load %arg11[%c6, %c0_28] : memref<8x128xf32, #tpu.memory_space<vmem>>, vector<1x128xf32>
    tpu.vector_store %arg11[%c6, %c0_28], %65 {strides = array<i32>} : memref<8x128xf32, #tpu.memory_space<vmem>>, vector<1x128xf32>,
    %c7_i32 = arith.constant 7 : i32
    %67 = arith.addi %3, %c7_i32 : i32
    %68 = arith.index_cast %arg1 : i32 to index
    %69 = arith.index_cast %67 : i32 to index
    %70 = memref.load %arg2[%68, %69] : memref<1x8xi32, #tpu.memory_space<smem>>
    %c0_i32_29 = arith.constant 0 : i32
    %c31_i32_30 = arith.constant 31 : i32
    %71 = arith.maxsi %c0_i32_29, %70 : i32
    %72 = arith.minsi %c31_i32_30, %71 : i32
    %73 = arith.index_cast %72 : i32 to index
    %c0_31 = arith.constant 0 : index
    %74 = vector.load %arg3[%73, %c0_31] : memref<32x128xf32, #tpu.memory_space<vmem>>, vector<1x128xf32>
    %c7 = arith.constant 7 : index
    %c0_32 = arith.constant 0 : index
    %75 = vector.load %arg11[%c7, %c0_32] : memref<8x128xf32, #tpu.memory_space<vmem>>, vector<1x128xf32>
    tpu.vector_store %arg11[%c7, %c0_32], %74 {strides = array<i32>} : memref<8x128xf32, #tpu.memory_space<vmem>>, vector<1x128xf32>,
    %c0_33 = arith.constant 0 : index
    %c0_34 = arith.constant 0 : index
    %76 = vector.load %arg11[%c0_33, %c0_34] : memref<8x128xf32, #tpu.memory_space<vmem>>, vector<8x128xf32>
    %c0_35 = arith.constant 0 : index
    %c0_36 = arith.constant 0 : index
    %77 = vector.load %arg12[%c0_35, %c0_36] : memref<8x128xf32, #tpu.memory_space<vmem>>, vector<8x128xf32>
    %78 = tpu.concatenate %76, %77 in 1 : vector<8x128xf32>, vector<8x128xf32> -> vector<8x256xf32>
    %c0_37 = arith.constant 0 : index
    %c0_38 = arith.constant 0 : index
    %79 = vector.load %arg5[%c0_37, %c0_38] : memref<256x128xf32, #tpu.memory_space<vmem>>, vector<256x128xf32>
    %cst = arith.constant dense<0.000000e+00> : vector<8x128xf32>
    %80 = tpu.matmul %78, %79, %cst {dimension_numbers = #tpu.dot_dimension_numbers<[1], [0], [0], [1], [0, 0, 1, 1], [], []>} : vector<8x256xf32>, vector<256x128xf32>, vector<8x128xf32> -> vector<8x128xf32>
    %c0_39 = arith.constant 0 : index
    %c0_40 = arith.constant 0 : index
    %81 = vector.load %arg6[%c0_39, %c0_40] : memref<1x128xf32, #tpu.memory_space<vmem>>, vector<1x128xf32>
    %82 = vector.broadcast %81 : vector<1x128xf32> to vector<8x128xf32>
    %83 = arith.addf %80, %82 : vector<8x128xf32>
    %84 = math.tanh %83 : vector<8x128xf32>
    %c0_41 = arith.constant 0 : index
    %c0_42 = arith.constant 0 : index
    %85 = vector.load %arg12[%c0_41, %c0_42] : memref<8x128xf32, #tpu.memory_space<vmem>>, vector<8x128xf32>
    tpu.vector_store %arg12[%c0_41, %c0_42], %84 {strides = array<i32>} : memref<8x128xf32, #tpu.memory_space<vmem>>, vector<8x128xf32>,
    %c0_43 = arith.constant 0 : index
    %c0_44 = arith.constant 0 : index
    %86 = vector.load %arg7[%c0_43, %c0_44] : memref<128x128xf32, #tpu.memory_space<vmem>>, vector<128x128xf32>
    %cst_45 = arith.constant dense<0.000000e+00> : vector<8x128xf32>
    %87 = tpu.matmul %84, %86, %cst_45 {dimension_numbers = #tpu.dot_dimension_numbers<[1], [0], [0], [1], [0, 0, 1, 1], [], []>} : vector<8x128xf32>, vector<128x128xf32>, vector<8x128xf32> -> vector<8x128xf32>
    %c0_46 = arith.constant 0 : index
    %c0_47 = arith.constant 0 : index
    %88 = vector.load %arg8[%c0_46, %c0_47] : memref<1x128xf32, #tpu.memory_space<vmem>>, vector<1x128xf32>
    %89 = vector.broadcast %88 : vector<1x128xf32> to vector<8x128xf32>
    %90 = arith.addf %87, %89 : vector<8x128xf32>
    %c0_48 = arith.constant 0 : index
    %c0_49 = arith.constant 0 : index
    %c0_50 = arith.constant 0 : index
    %91 = vector.load %arg9[%c0_48, %c0_49, %c0_50] : memref<1x8x128xf32, #tpu.memory_space<vmem>>, vector<1x8x128xf32>
    %92 = vector.shape_cast %91 : vector<1x8x128xf32> to vector<8x128xf32>
    %93 = vector.shape_cast %90 : vector<8x128xf32> to vector<1x8x128xf32>
    tpu.vector_store %arg9[%c0_48, %c0_49, %c0_50], %93 {strides = array<i32>} : memref<1x8x128xf32, #tpu.memory_space<vmem>>, vector<1x8x128xf32>,
    %c0_i32_51 = arith.constant 0 : i32
    %94 = arith.cmpi eq, %arg1, %c0_i32_51 : i32
    %95 = arith.extui %94 : i1 to i32
    %c0_i32_52 = arith.constant 0 : i32
    %96 = arith.cmpi ne, %95, %c0_i32_52 : i32
    scf.if %96 {
      %c0_53 = arith.constant 0 : index
      %c0_54 = arith.constant 0 : index
      %97 = vector.load %arg10[%c0_53, %c0_54] : memref<8x128xf32, #tpu.memory_space<vmem>>, vector<8x128xf32>
      tpu.vector_store %arg10[%c0_53, %c0_54], %84 {strides = array<i32>} : memref<8x128xf32, #tpu.memory_space<vmem>>, vector<8x128xf32>,
    } else {
    }
    return
  }
  func.func @transform_0(%arg0: i32, %arg1: i32) -> (i32, i32) {
    %c0_i32 = arith.constant 0 : i32
    %c0_i32_0 = arith.constant 0 : i32
    %c0_i32_1 = arith.constant 0 : i32
    return %c0_i32, %c0_i32_0 : i32, i32
  }
  func.func @transform_1(%arg0: i32, %arg1: i32) -> (i32, i32) {
    %c0_i32 = arith.constant 0 : i32
    %c0_i32_0 = arith.constant 0 : i32
    %c0_i32_1 = arith.constant 0 : i32
    return %c0_i32, %c0_i32_0 : i32, i32
  }
  func.func @transform_2(%arg0: i32, %arg1: i32) -> (i32, i32) {
    %c0_i32 = arith.constant 0 : i32
    %c0_i32_0 = arith.constant 0 : i32
    return %arg0, %c0_i32 : i32, i32
  }
  func.func @transform_3(%arg0: i32, %arg1: i32) -> (i32, i32) {
    %c0_i32 = arith.constant 0 : i32
    %c0_i32_0 = arith.constant 0 : i32
    %c0_i32_1 = arith.constant 0 : i32
    return %c0_i32, %c0_i32_0 : i32, i32
  }
  func.func @transform_4(%arg0: i32, %arg1: i32) -> (i32, i32) {
    %c0_i32 = arith.constant 0 : i32
    %c0_i32_0 = arith.constant 0 : i32
    %c0_i32_1 = arith.constant 0 : i32
    return %c0_i32, %c0_i32_0 : i32, i32
  }
  func.func @transform_5(%arg0: i32, %arg1: i32) -> (i32, i32) {
    %c0_i32 = arith.constant 0 : i32
    %c0_i32_0 = arith.constant 0 : i32
    %c0_i32_1 = arith.constant 0 : i32
    return %c0_i32, %c0_i32_0 : i32, i32
  }
  func.func @transform_6(%arg0: i32, %arg1: i32) -> (i32, i32) {
    %c0_i32 = arith.constant 0 : i32
    %c0_i32_0 = arith.constant 0 : i32
    %c0_i32_1 = arith.constant 0 : i32
    return %c0_i32, %c0_i32_0 : i32, i32
  }
  func.func @transform_7(%arg0: i32, %arg1: i32) -> (i32, i32, i32) {
    %c0_i32 = arith.constant 0 : i32
    %c0_i32_0 = arith.constant 0 : i32
    return %arg1, %arg0, %c0_i32 : i32, i32, i32
  }
  func.func @transform_8(%arg0: i32, %arg1: i32) -> (i32, i32) {
    %c0_i32 = arith.constant 0 : i32
    %c0_i32_0 = arith.constant 0 : i32
    return %arg0, %c0_i32 : i32, i32
  }
}

</mosaic_0001>

<llo_original>
// kernel: _forward_single_step.1
$region0: #{_forward_single_step.1}
  #allocation0 [shape = 'u32[]', space=smem, size = 0x4, offset = 0x4, fixed_abs, tag = 'smem constant byte address 0x4 - core index']
  #allocation1 [shape = 'u32[72,128]{1,0:T(1,128)}', space=vmem, size = 0x9000, scoped, tag = 'internal scratch']
  #allocation2 [shape = 'f32[8,128]{1,0:T(8,128)}', space=vmem, size = 0x1000, scoped, tag = 'scratch operand']
  #allocation3 [shape = 'f32[8,128]{1,0:T(8,128)}', space=vmem, size = 0x1000, scoped, tag = 'scratch operand']
  %s0 = inlined_call_operand.vmem [shape: s32[1,8], index: 0, kind: input, shape index: {}]
  %s1 = inlined_call_operand.vmem [shape: f32[32,128], index: 1, kind: input, shape index: {}]
  %s2 = inlined_call_operand.vmem [shape: f32[8,128], index: 2, kind: input, shape index: {}, may-alias: {2,8}]
  %s3 = inlined_call_operand.hbm [shape: f32[256,128], index: 3, kind: input, shape index: {}]
  %s4 = inlined_call_operand.vmem [shape: f32[1,128], index: 4, kind: input, shape index: {}]
  %s5 = inlined_call_operand.hbm [shape: f32[128,128], index: 5, kind: input, shape index: {}]
  %s6 = inlined_call_operand.vmem [shape: f32[1,128], index: 6, kind: input, shape index: {}]
  %s7 = inlined_call_operand.vmem [shape: f32[1,8,128], index: 7, kind: output, shape index: {0}]
  %s8 = inlined_call_operand.vmem [shape: f32[8,128], index: 8, kind: output, shape index: {1}, may-alias: {2,8}]
  %9 = xla_tuple %s7, %s8
  %s10 = sld [smem:[#allocation0]]
  $region66: #{_forward_single_step.1} parent=0
    _
  %s12 = ssub.s32 1, %s10
  %s13 = scalar_select 0, %s12, %s10
  $region1: #{_forward_single_step.1} parent=0
    #allocation4 [shape = 'u8[512]{0}', space=smem, size = 0x200, scoped, tag = 'input window, operand 0, single buffered']
    #allocation5 [shape = 's32[1]{0}', space=sflag, size = 0x4, scoped, tag = 'scoped memory for _forward_single_step.1']
    #allocation6 [shape = 's32[1]{0}', space=sflag, size = 0x4, scoped, tag = 'scoped memory for _forward_single_step.1']
    #allocation7 [shape = 'u8[131072]{0}', space=vmem, size = 0x20000, scoped, tag = 'input window, operand 3, single buffered']
    #allocation8 [shape = 'u8[65536]{0}', space=vmem, size = 0x10000, scoped, tag = 'input window, operand 5, single buffered']
    #allocation9 [shape = 's32[1]{0}', space=sflag, size = 0x4, scoped, tag = 'scoped memory for _forward_single_step.1']
    %14 = vsyncpa [#allocation6], 0
    %15 = vsyncpa [#allocation5], 0
    %16 = vsyncpa [#allocation9], 0
    // Predicated region
    $region2: #{_forward_single_step.1} parent=1 // pred_check
      _
    $region3: #{_forward_single_step.1} parent=1 // pred_check_branch
      %18 = sbr.rel (0) target = $region5
    $region4: #{_forward_single_step.1} parent=1 // pred_region
      %20 = vsyncadd [#allocation6], 0
      %s22 = sshll.u32 %s0, 4
      %s23 = int_to_ptr.vmem [resolvable:$true] %s22
      %25 = dma.vmem_to_smem %s23, 16, [#allocation4], [#allocation6]
    $region5: #{_forward_single_step.1} parent=1 // pred_fallthru
      _
    // Predicated region
    $region6: #{_forward_single_step.1} parent=1 // pred_check
      _
    $region7: #{_forward_single_step.1} parent=1 // pred_check_branch
      %27 = sbr.rel (0) target = $region9
    $region8: #{_forward_single_step.1} parent=1 // pred_region
      _
    $region9: #{_forward_single_step.1} parent=1 // pred_fallthru
      _
    // Predicated region
    $region10: #{_forward_single_step.1} parent=1 // pred_check
      _
    $region11: #{_forward_single_step.1} parent=1 // pred_check_branch
      %29 = sbr.rel (0) target = $region13
    $region12: #{_forward_single_step.1} parent=1 // pred_region
      _
    $region13: #{_forward_single_step.1} parent=1 // pred_fallthru
      _
    // Predicated region
    $region14: #{_forward_single_step.1} parent=1 // pred_check
      _
    $region15: #{_forward_single_step.1} parent=1 // pred_check_branch
      %31 = sbr.rel (0) target = $region17
    $region16: #{_forward_single_step.1} parent=1 // pred_region
      %33 = vsyncadd [#allocation5], 0
      %s34 = sshll.u32 %s3, 4
      %s35 = int_to_ptr.hbm [resolvable:$true] %s34
      %s36 = sshll.u32 [#allocation7], 4
      %s37 = int_to_ptr.vmem [resolvable:$true] %s36
      %42 = dma.hbm_to_vmem [thread:$0]  %s35, 4096, %s37, [#allocation5], 128, 128, 8
    $region17: #{_forward_single_step.1} parent=1 // pred_fallthru
      _
    // Predicated region
    $region18: #{_forward_single_step.1} parent=1 // pred_check
      _
    $region19: #{_forward_single_step.1} parent=1 // pred_check_branch
      %44 = sbr.rel (0) target = $region21
    $region20: #{_forward_single_step.1} parent=1 // pred_region
      _
    $region21: #{_forward_single_step.1} parent=1 // pred_fallthru
      _
    // Predicated region
    $region22: #{_forward_single_step.1} parent=1 // pred_check
      _
    $region23: #{_forward_single_step.1} parent=1 // pred_check_branch
      %46 = sbr.rel (0) target = $region25
    $region24: #{_forward_single_step.1} parent=1 // pred_region
      %48 = vsyncadd [#allocation9], 0
      %s49 = sshll.u32 %s5, 4
      %s50 = int_to_ptr.hbm [resolvable:$true] %s49
      %s51 = sshll.u32 [#allocation8], 4
      %s52 = int_to_ptr.vmem [resolvable:$true] %s51
      %57 = dma.hbm_to_vmem [thread:$0]  %s50, 2048, %s52, [#allocation9], 128, 128, 8
    $region25: #{_forward_single_step.1} parent=1 // pred_fallthru
      _
    // Predicated region
    $region26: #{_forward_single_step.1} parent=1 // pred_check
      _
    $region27: #{_forward_single_step.1} parent=1 // pred_check_branch
      %59 = sbr.rel (0) target = $region29
    $region28: #{_forward_single_step.1} parent=1 // pred_region
      _
    $region29: #{_forward_single_step.1} parent=1 // pred_fallthru
      _
    // Predicated region
    $region30: #{_forward_single_step.1} parent=1 // pred_check
      _
    $region31: #{_forward_single_step.1} parent=1 // pred_check_branch
      %61 = sbr.rel (0) target = $region33
    $region32: #{_forward_single_step.1} parent=1 // pred_region
      %63 = dma.done [#allocation6], 16
    $region33: #{_forward_single_step.1} parent=1 // pred_fallthru
      _
    // Predicated region
    $region34: #{_forward_single_step.1} parent=1 // pred_check
      _
    $region35: #{_forward_single_step.1} parent=1 // pred_check_branch
      %65 = sbr.rel (0) target = $region37
    $region36: #{_forward_single_step.1} parent=1 // pred_region
      %67 = dma.done [#allocation5], 4096
    $region37: #{_forward_single_step.1} parent=1 // pred_fallthru
      _
    // Predicated region
    $region38: #{_forward_single_step.1} parent=1 // pred_check
      _
    $region39: #{_forward_single_step.1} parent=1 // pred_check_branch
      %69 = sbr.rel (0) target = $region41
    $region40: #{_forward_single_step.1} parent=1 // pred_region
      %71 = dma.done [#allocation9], 2048
    $region41: #{_forward_single_step.1} parent=1 // pred_fallthru
      _
    %72 = sfence
    %p73 = scmp.eq.s32.totalorder 0, 0
    // Predicated region
    $region42: #{_forward_single_step.1} parent=1 // pred_check
      %p74 = pneg %p73
    $region43: #{_forward_single_step.1} parent=1 // pred_check_branch
      %76 = sbr.rel (%p74) target = $region45
    $region44: #{_forward_single_step.1} parent=1 // pred_region
      %v77 = vld [vmem:[%s2] sm:$0xff]
      %78 = vst [vmem:[#allocation3] sm:$0xff] %v77
    $region45: #{_forward_single_step.1} parent=1 // pred_fallthru
      _
    %s79 = smul.u32 0, 8
    %s80 = sshra.s32 %s79, 7
    %s81 = sand.u32 %s79, 127
    %s82 = sadd.s32 %s80, 0
    %s83 = smul.u32 %s82, 128
    %s84 = sshra.s32 %s79, 7
    %s85 = sand.u32 %s79, 127
    %s86 = sadd.s32 %s83, %s85
    %s87 = sld [smem:[#allocation4 + %s86]]
    %p88 = scmp.gt.s32.totalorder %s87, 0
    %s89 = scalar_select %p88, %s87, 0
    %p90 = scmp.lt.s32.totalorder %s89, 31
    %s91 = scalar_select %p90, %s89, 31
    %s92 = scalar_lea.vmem %s1, %s91
    %v93 = vld [vmem:[%s92] sm:$0x1]
    %94 = vst [vmem:[#allocation2] sm:$0x1] %v93
    %s95 = sadd.s32 %s79, 1
    %s96 = sshra.s32 %s95, 7
    %s97 = sand.u32 %s95, 127
    %s98 = sadd.s32 %s96, 0
    %s99 = smul.u32 %s98, 128
    %s100 = sshra.s32 %s95, 7
    %s101 = sand.u32 %s95, 127
    %s102 = sadd.s32 %s99, %s101
    %s103 = sld [smem:[#allocation4 + %s102]]
    %p104 = scmp.gt.s32.totalorder %s103, 0
    %s105 = scalar_select %p104, %s103, 0
    %p106 = scmp.lt.s32.totalorder %s105, 31
    %s107 = scalar_select %p106, %s105, 31
    %s108 = scalar_lea.vmem %s1, %s107
    %v109 = vld [vmem:[%s108] sm:$0x1]
    %110 = vst [vmem:[#allocation2 + $0x1] sm:$0x1] %v109
    %s111 = sadd.s32 %s79, 2
    %s112 = sshra.s32 %s111, 7
    %s113 = sand.u32 %s111, 127
    %s114 = sadd.s32 %s112, 0
    %s115 = smul.u32 %s114, 128
    %s116 = sshra.s32 %s111, 7
    %s117 = sand.u32 %s111, 127
    %s118 = sadd.s32 %s115, %s117
    %s119 = sld [smem:[#allocation4 + %s118]]
    %p120 = scmp.gt.s32.totalorder %s119, 0
    %s121 = scalar_select %p120, %s119, 0
    %p122 = scmp.lt.s32.totalorder %s121, 31
    %s123 = scalar_select %p122, %s121, 31
    %s124 = scalar_lea.vmem %s1, %s123
    %v125 = vld [vmem:[%s124] sm:$0x1]
    %126 = vst [vmem:[#allocation2 + $0x2] sm:$0x1] %v125
    %s127 = sadd.s32 %s79, 3
    %s128 = sshra.s32 %s127, 7
    %s129 = sand.u32 %s127, 127
    %s130 = sadd.s32 %s128, 0
    %s131 = smul.u32 %s130, 128
    %s132 = sshra.s32 %s127, 7
    %s133 = sand.u32 %s127, 127
    %s134 = sadd.s32 %s131, %s133
    %s135 = sld [smem:[#allocation4 + %s134]]
    %p136 = scmp.gt.s32.totalorder %s135, 0
    %s137 = scalar_select %p136, %s135, 0
    %p138 = scmp.lt.s32.totalorder %s137, 31
    %s139 = scalar_select %p138, %s137, 31
    %s140 = scalar_lea.vmem %s1, %s139
    %v141 = vld [vmem:[%s140] sm:$0x1]
    %142 = vst [vmem:[#allocation2 + $0x3] sm:$0x1] %v141
    %s143 = sadd.s32 %s79, 4
    %s144 = sshra.s32 %s143, 7
    %s145 = sand.u32 %s143, 127
    %s146 = sadd.s32 %s144, 0
    %s147 = smul.u32 %s146, 128
    %s148 = sshra.s32 %s143, 7
    %s149 = sand.u32 %s143, 127
    %s150 = sadd.s32 %s147, %s149
    %s151 = sld [smem:[#allocation4 + %s150]]
    %p152 = scmp.gt.s32.totalorder %s151, 0
    %s153 = scalar_select %p152, %s151, 0
    %p154 = scmp.lt.s32.totalorder %s153, 31
    %s155 = scalar_select %p154, %s153, 31
    %s156 = scalar_lea.vmem %s1, %s155
    %v157 = vld [vmem:[%s156] sm:$0x1]
    %158 = vst [vmem:[#allocation2 + $0x4] sm:$0x1] %v157
    %s159 = sadd.s32 %s79, 5
    %s160 = sshra.s32 %s159, 7
    %s161 = sand.u32 %s159, 127
    %s162 = sadd.s32 %s160, 0
    %s163 = smul.u32 %s162, 128
    %s164 = sshra.s32 %s159, 7
    %s165 = sand.u32 %s159, 127
    %s166 = sadd.s32 %s163, %s165
    %s167 = sld [smem:[#allocation4 + %s166]]
    %p168 = scmp.gt.s32.totalorder %s167, 0
    %s169 = scalar_select %p168, %s167, 0
    %p170 = scmp.lt.s32.totalorder %s169, 31
    %s171 = scalar_select %p170, %s169, 31
    %s172 = scalar_lea.vmem %s1, %s171
    %v173 = vld [vmem:[%s172] sm:$0x1]
    %174 = vst [vmem:[#allocation2 + $0x5] sm:$0x1] %v173
    %s175 = sadd.s32 %s79, 6
    %s176 = sshra.s32 %s175, 7
    %s177 = sand.u32 %s175, 127
    %s178 = sadd.s32 %s176, 0
    %s179 = smul.u32 %s178, 128
    %s180 = sshra.s32 %s175, 7
    %s181 = sand.u32 %s175, 127
    %s182 = sadd.s32 %s179, %s181
    %s183 = sld [smem:[#allocation4 + %s182]]
    %p184 = scmp.gt.s32.totalorder %s183, 0
    %s185 = scalar_select %p184, %s183, 0
    %p186 = scmp.lt.s32.totalorder %s185, 31
    %s187 = scalar_select %p186, %s185, 31
    %s188 = scalar_lea.vmem %s1, %s187
    %v189 = vld [vmem:[%s188] sm:$0x1]
    %190 = vst [vmem:[#allocation2 + $0x6] sm:$0x1] %v189
    %s191 = sadd.s32 %s79, 7
    %s192 = sshra.s32 %s191, 7
    %s193 = sand.u32 %s191, 127
    %s194 = sadd.s32 %s192, 0
    %s195 = smul.u32 %s194, 128
    %s196 = sshra.s32 %s191, 7
    %s197 = sand.u32 %s191, 127
    %s198 = sadd.s32 %s195, %s197
    %s199 = sld [smem:[#allocation4 + %s198]]
    %p200 = scmp.gt.s32.totalorder %s199, 0
    %s201 = scalar_select %p200, %s199, 0
    %p202 = scmp.lt.s32.totalorder %s201, 31
    %s203 = scalar_select %p202, %s201, 31
    %s204 = scalar_lea.vmem %s1, %s203
    %v205 = vld [vmem:[%s204] sm:$0x1]
    %206 = vst [vmem:[#allocation2 + $0x7] sm:$0x1] %v205
    %v207 = vld [vmem:[#allocation2] sm:$0xff]
    %v208 = vld [vmem:[#allocation3] sm:$0xff]
    %v209 = vld [vmem:[#allocation7] sm:$0xff]
    %v210 = vld [vmem:[#allocation7 + $0x8] sm:$0xff]
    %v211 = vld [vmem:[#allocation7 + $0x10] sm:$0xff]
    %v212 = vld [vmem:[#allocation7 + $0x18] sm:$0xff]
    %v213 = vld [vmem:[#allocation7 + $0x20] sm:$0xff]
    %v214 = vld [vmem:[#allocation7 + $0x28] sm:$0xff]
    %v215 = vld [vmem:[#allocation7 + $0x30] sm:$0xff]
    %v216 = vld [vmem:[#allocation7 + $0x38] sm:$0xff]
    %v217 = vld [vmem:[#allocation7 + $0x40] sm:$0xff]
    %v218 = vld [vmem:[#allocation7 + $0x48] sm:$0xff]
    %v219 = vld [vmem:[#allocation7 + $0x50] sm:$0xff]
    %v220 = vld [vmem:[#allocation7 + $0x58] sm:$0xff]
    %v221 = vld [vmem:[#allocation7 + $0x60] sm:$0xff]
    %v222 = vld [vmem:[#allocation7 + $0x68] sm:$0xff]
    %v223 = vld [vmem:[#allocation7 + $0x70] sm:$0xff]
    %v224 = vld [vmem:[#allocation7 + $0x78] sm:$0xff]
    %v225 = vld [vmem:[#allocation7 + $0x80] sm:$0xff]
    %v226 = vld [vmem:[#allocation7 + $0x88] sm:$0xff]
    %v227 = vld [vmem:[#allocation7 + $0x90] sm:$0xff]
    %v228 = vld [vmem:[#allocation7 + $0x98] sm:$0xff]
    %v229 = vld [vmem:[#allocation7 + $0xa0] sm:$0xff]
    %v230 = vld [vmem:[#allocation7 + $0xa8] sm:$0xff]
    %v231 = vld [vmem:[#allocation7 + $0xb0] sm:$0xff]
    %v232 = vld [vmem:[#allocation7 + $0xb8] sm:$0xff]
    %v233 = vld [vmem:[#allocation7 + $0xc0] sm:$0xff]
    %v234 = vld [vmem:[#allocation7 + $0xc8] sm:$0xff]
    %v235 = vld [vmem:[#allocation7 + $0xd0] sm:$0xff]
    %v236 = vld [vmem:[#allocation7 + $0xd8] sm:$0xff]
    %v237 = vld [vmem:[#allocation7 + $0xe0] sm:$0xff]
    %v238 = vld [vmem:[#allocation7 + $0xe8] sm:$0xff]
    %v239 = vld [vmem:[#allocation7 + $0xf0] sm:$0xff]
    %v240 = vld [vmem:[#allocation7 + $0xf8] sm:$0xff]
    %v241 = vld [vmem:[%s4] sm:$0x1]
    %v243 = vperm.slane %v241, 0
    %245 = vmatpush.msra.mxu0 %v224
    %246 = vmatpush.msra.mxu0 %v223
    %247 = vmatpush.msra.mxu0 %v222
    %248 = vmatpush.msra.mxu0 %v221
    %249 = vmatpush.msra.mxu0 %v220
    %250 = vmatpush.msra.mxu0 %v219
    %251 = vmatpush.msra.mxu0 %v218
    %252 = vmatpush.msra.mxu0 %v217
    %253 = vmatpush.msra.mxu0 %v216
    %254 = vmatpush.msra.mxu0 %v215
    %255 = vmatpush.msra.mxu0 %v214
    %256 = vmatpush.msra.mxu0 %v213
    %257 = vmatpush.msra.mxu0 %v212
    %258 = vmatpush.msra.mxu0 %v211
    %259 = vmatpush.msra.mxu0 %v210
    %260 = vmatpush.msra.mxu0 %v209
    %261 = vmatmul.f32.gmra.mxu0 %v207
    %v262 = vpop.f32.mrf.mxu0
    %v263 = vadd.f32 %v243, %v262
    %264 = vdwg.mxu0
    %265 = vmatpush.msra.mxu0 %v240
    %266 = vmatpush.msra.mxu0 %v239
    %267 = vmatpush.msra.mxu0 %v238
    %268 = vmatpush.msra.mxu0 %v237
    %269 = vmatpush.msra.mxu0 %v236
    %270 = vmatpush.msra.mxu0 %v235
    %271 = vmatpush.msra.mxu0 %v234
    %272 = vmatpush.msra.mxu0 %v233
    %273 = vmatpush.msra.mxu0 %v232
    %274 = vmatpush.msra.mxu0 %v231
    %275 = vmatpush.msra.mxu0 %v230
    %276 = vmatpush.msra.mxu0 %v229
    %277 = vmatpush.msra.mxu0 %v228
    %278 = vmatpush.msra.mxu0 %v227
    %279 = vmatpush.msra.mxu0 %v226
    %280 = vmatpush.msra.mxu0 %v225
    %281 = vmatmul.f32.gmra.mxu0 %v208
    %v282 = vpop.f32.mrf.mxu0
    %v283 = vadd.f32 %v263, %v282
    %284 = vdwg.mxu0
    %v285 = vtanh.pop %v283
    %286 = vst [vmem:[#allocation3] sm:$0xff] %v285
    %v287 = vld [vmem:[#allocation8] sm:$0xff]
    %v288 = vld [vmem:[#allocation8 + $0x8] sm:$0xff]
    %v289 = vld [vmem:[#allocation8 + $0x10] sm:$0xff]
    %v290 = vld [vmem:[#allocation8 + $0x18] sm:$0xff]
    %v291 = vld [vmem:[#allocation8 + $0x20] sm:$0xff]
    %v292 = vld [vmem:[#allocation8 + $0x28] sm:$0xff]
    %v293 = vld [vmem:[#allocation8 + $0x30] sm:$0xff]
    %v294 = vld [vmem:[#allocation8 + $0x38] sm:$0xff]
    %v295 = vld [vmem:[#allocation8 + $0x40] sm:$0xff]
    %v296 = vld [vmem:[#allocation8 + $0x48] sm:$0xff]
    %v297 = vld [vmem:[#allocation8 + $0x50] sm:$0xff]
    %v298 = vld [vmem:[#allocation8 + $0x58] sm:$0xff]
    %v299 = vld [vmem:[#allocation8 + $0x60] sm:$0xff]
    %v300 = vld [vmem:[#allocation8 + $0x68] sm:$0xff]
    %v301 = vld [vmem:[#allocation8 + $0x70] sm:$0xff]
    %v302 = vld [vmem:[#allocation8 + $0x78] sm:$0xff]
    %v303 = vld [vmem:[%s6] sm:$0x1]
    %v305 = vperm.slane %v303, 0
    %307 = vmatpush.msra.mxu0 %v302
    %308 = vmatpush.msra.mxu0 %v301
    %309 = vmatpush.msra.mxu0 %v300
    %310 = vmatpush.msra.mxu0 %v299
    %311 = vmatpush.msra.mxu0 %v298
    %312 = vmatpush.msra.mxu0 %v297
    %313 = vmatpush.msra.mxu0 %v296
    %314 = vmatpush.msra.mxu0 %v295
    %315 = vmatpush.msra.mxu0 %v294
    %316 = vmatpush.msra.mxu0 %v293
    %317 = vmatpush.msra.mxu0 %v292
    %318 = vmatpush.msra.mxu0 %v291
    %319 = vmatpush.msra.mxu0 %v290
    %320 = vmatpush.msra.mxu0 %v289
    %321 = vmatpush.msra.mxu0 %v288
    %322 = vmatpush.msra.mxu0 %v287
    %323 = vmatmul.f32.gmra.mxu0 %v285
    %v324 = vpop.f32.mrf.mxu0
    %v325 = vadd.f32 %v305, %v324
    %326 = vdwg.mxu0
    %327 = vst [vmem:[%s7] sm:$0xff] %v325
    // Predicated region
    $region46: #{_forward_single_step.1} parent=1 // pred_check
      %p328 = pneg %p73
    $region47: #{_forward_single_step.1} parent=1 // pred_check_branch
      %330 = sbr.rel (%p328) target = $region49
    $region48: #{_forward_single_step.1} parent=1 // pred_region
      %331 = vst [vmem:[%s8] sm:$0xff] %v285
    $region49: #{_forward_single_step.1} parent=1 // pred_fallthru
      _
    // Predicated region
    $region50: #{_forward_single_step.1} parent=1 // pred_check
      _
    $region51: #{_forward_single_step.1} parent=1 // pred_check_branch
      %333 = sbr.rel (0) target = $region53
    $region52: #{_forward_single_step.1} parent=1 // pred_region
      _
    $region53: #{_forward_single_step.1} parent=1 // pred_fallthru
      _
    // Predicated region
    $region54: #{_forward_single_step.1} parent=1 // pred_check
      _
    $region55: #{_forward_single_step.1} parent=1 // pred_check_branch
      %335 = sbr.rel (0) target = $region57
    $region56: #{_forward_single_step.1} parent=1 // pred_region
      _
    $region57: #{_forward_single_step.1} parent=1 // pred_fallthru
      _
    // Predicated region
    $region58: #{_forward_single_step.1} parent=1 // pred_check
      _
    $region59: #{_forward_single_step.1} parent=1 // pred_check_branch
      %337 = sbr.rel (0) target = $region61
    $region60: #{_forward_single_step.1} parent=1 // pred_region
      _
    $region61: #{_forward_single_step.1} parent=1 // pred_fallthru
      _
    // Predicated region
    $region62: #{_forward_single_step.1} parent=1 // pred_check
      _
    $region63: #{_forward_single_step.1} parent=1 // pred_check_branch
      %339 = sbr.rel (0) target = $region65
    $region64: #{_forward_single_step.1} parent=1 // pred_region
      _
    $region65: #{_forward_single_step.1} parent=1 // pred_fallthru
      _
    %340 = vsyncpa [#allocation5], 1
    %341 = vsyncpa [#allocation9], 1
    %342 = vsyncpa [#allocation6], 1

</llo_original>
